<compile_context>
chip_gen: v5e
topology: v5e:2x2
jax: 0.10.0
libtpu: 0.0.40
codegen_flags: <defaults>
</compile_context>

<pallas_src>
import jax
import jax.numpy as jnp
from jax import lax
from jax.experimental import pallas as pl
from jax.experimental.pallas import tpu as pltpu

# --- CombinedLoss2 default hyper-parameters ---
ALPHA = 0.7      # focal alpha, also tversky false-positive weight
BETA = 0.3       # tversky false-negative weight, also l2 weight
GAMMA = 2.0      # focal gamma (== 2 -> implemented as jnp.square in the kernel)
LAMBDA1 = 0.5
LAMBDA2 = 0.25
SMOOTH = 1e-5

_LANES = 128
_MAX_BLOCK_ROWS = 2048   # (2048,128) f32 block = 1 MiB; 2 inputs x 2 pipeline buffers
                         # + 3 tiny (8,128) accumulators ~= 4 MiB (<< 16 MiB default limit).
_NUM_SPLITS = 2          # leading "parallel" grid axis: both TCs on v7x, cheap elsewhere.
_PAD_LOGIT = -1e4        # sigmoid(-1e4) == 0 and BCE(-1e4, target=0) == 0, so padded
                         # elements contribute exactly 0 to every partial sum (no mask).
_C3 = 1.0 - ALPHA - BETA  # coefficient of tp inside the collapsed tversky denominator


def _round_up(x, m):
    return ((x + m - 1) // m) * m


def _sublane_multiple(dtype):
    """Native second-to-last tile multiple for a dtype: f32->8, bf16->16, int8->32."""
    bits = jnp.dtype(dtype).itemsize * 8
    return max(8, (32 // bits) * 8)


def _geometry(n_elems, sub_mult):
    """Static slab geometry: (padded_rows, block_rows, steps_per_split, sub_rows)."""
    rows_min = -(-n_elems // _LANES)                       # ceil(n / 128)
    per_split = -(-rows_min // _NUM_SPLITS)
    block_rows = min(_MAX_BLOCK_ROWS, _round_up(per_split, sub_mult))
    steps = -(-rows_min // (_NUM_SPLITS * block_rows))
    rows = _NUM_SPLITS * block_rows * steps
    # inner sub-tile: keeps the per-element chain register-resident (block_rows is always
    # a multiple of 8, so this always resolves).
    sub_rows = next(s for s in (32, 16, 8) if block_rows % s == 0)
    return rows, block_rows, steps, sub_rows


def _to_slab(flat, rows, pad_value):
    """Reshape a flat tensor into a lane-dense (rows, 128) slab.

    Pads only when needed (static check), using a value whose loss contribution is
    exactly zero -> no mask stream required."""
    n = flat.shape[0]
    n_pad = rows * _LANES
    if n_pad != n:
        flat = jnp.pad(flat, (0, n_pad - n), constant_values=pad_value)
    return flat.reshape(rows, _LANES)


# ---------------------------------------------------------------------------
# Kernel: per-split partial sums of
#   [0] focal + bce, [1] tp = y*sigmoid(x), [2] den = ALPHA*sigmoid(x) + BETA*y (+ C3*tp)
# reduced per sub-tile into vreg-resident carries, accumulated into (8,128) scratch,
# and fully reduced + stored once at the last grid step.
# ---------------------------------------------------------------------------
def _make_kernel(block_rows, sub_rows):
    n_sub = block_rows // sub_rows
    # largest unroll factor (<= 8) that divides the trip count
    unroll = max(u for u in (8, 4, 2, 1) if n_sub % u == 0)

    def fold8(t):
        """Fold a (sub_rows,128) term into a single (8,128) vreg with VALU adds only."""
        acc = t[0:8, :]
        for r in range(8, sub_rows, 8):
            acc = acc + t[r:r + 8, :]
        return acc

    def kernel(pred_ref, targ_ref, out_ref, acc_fb, acc_tp, acc_den):
        i = pl.program_id(1)

        @pl.when(i == 0)
        def _init():
            z = jnp.zeros((8, _LANES), jnp.float32)
            acc_fb[...] = z
            acc_tp[...] = z
            acc_den[...] = z

        def sub_tile(start, carry):
            fb, tp, den = carry
            x = pred_ref[pl.ds(start, sub_rows), :].astype(jnp.float32)
            y = targ_ref[pl.ds(start, sub_rows), :].astype(jnp.float32)

            # Numerically-stable BCE-with-logits (== binary_cross_entropy_with_logits):
            #   bce = max(x, 0) - x*y + log1p(exp(-|x|))
            e = jnp.exp(-jnp.abs(x))                      # EUP exp; reused for sigmoid
            bce = jnp.maximum(x, 0.0) - x * y + jnp.log1p(e)
            pt = jnp.exp(-bce)                            # kept: soft-target safe
            fb_term = (ALPHA * jnp.square(1.0 - pt) + 1.0) * bce   # focal + bce fused

            # sigmoid from the already-computed exp(-|x|); EUP approx reciprocal + one
            # Newton-Raphson refinement keeps f32 accuracy off the VALU divide path.
            d = 1.0 + e
            inv = pl.reciprocal(d, approx=True)
            inv = inv * (2.0 - d * inv)
            sig = jnp.where(x >= 0.0, inv, e * inv)

            tp_term = y * sig
            den_term = ALPHA * sig + BETA * y
            if abs(_C3) > 1e-12:                          # statically dropped for defaults
                den_term = den_term + _C3 * tp_term

            return (fb + fold8(fb_term),
                    tp + fold8(tp_term),
                    den + fold8(den_term))

        init = (acc_fb[...], acc_tp[...], acc_den[...])
        if n_sub == 1:
            fb, tp, den = sub_tile(0, init)
        else:
            fb, tp, den = lax.fori_loop(
                0, n_sub,
                lambda t, c: sub_tile(pl.multiple_of(t * sub_rows, sub_rows), c),
                init, unroll=unroll)
        acc_fb[...] = fb
        acc_tp[...] = tp
        acc_den[...] = den

        @pl.when(i == pl.num_programs(1) - 1)
        def _finalize():
            def bcast(s):
                return jnp.full((8, _LANES), s, jnp.float32)
            out_ref[0] = bcast(jnp.sum(acc_fb[...]))
            out_ref[1] = bcast(jnp.sum(acc_tp[...]))
            out_ref[2] = bcast(jnp.sum(acc_den[...]))

    return kernel


def _loss_partial_sums(pred_slab, targ_slab, block_rows, steps, sub_rows):
    in_spec = pl.BlockSpec((block_rows, _LANES), lambda c, i: (c * steps + i, 0))
    # One (3, 8, 128) partial-sum block per parallel split; scalars are broadcast into the
    # tile so the output stays lane-dense and the write is a plain full-tile store.
    out_spec = pl.BlockSpec((3, 8, _LANES), lambda c, i: (c, 0, 0))
    acc_spec = pltpu.VMEM((8, _LANES), jnp.float32)
    return pl.pallas_call(
        _make_kernel(block_rows, sub_rows),
        out_shape=jax.ShapeDtypeStruct((_NUM_SPLITS * 3, 8, _LANES), jnp.float32),
        grid_spec=pltpu.PrefetchScalarGridSpec(
            num_scalar_prefetch=0,
            grid=(_NUM_SPLITS, steps),
            in_specs=[in_spec, in_spec],
            out_specs=out_spec,
            scratch_shapes=[acc_spec, acc_spec, acc_spec],
        ),
        compiler_params=pltpu.CompilerParams(
            dimension_semantics=("parallel", "arbitrary")),
    )(pred_slab, targ_slab)


# ---------------------------------------------------------------------------
# Wrapper: CombinedLoss2.forward(pred, target, model_params)
# ---------------------------------------------------------------------------
@jax.jit
def combined_loss2(pred, target, model_params):
    n = pred.size                                        # static under jit
    sub_mult = max(_sublane_multiple(pred.dtype), _sublane_multiple(target.dtype))
    rows, block_rows, steps, sub_rows = _geometry(n, sub_mult)

    # Keep original dtypes (bf16 stays bf16 in HBM; kernel casts in-register).
    pred_slab = _to_slab(pred.reshape(-1), rows, _PAD_LOGIT)
    targ_slab = _to_slab(target.reshape(-1), rows, 0.0)

    out_arr = _loss_partial_sums(pred_slab, targ_slab, block_rows, steps, sub_rows)
    partial = out_arr[:, 0, 0].reshape(_NUM_SPLITS, 3)   # (splits, 3) per-core sums
    sums = partial.sum(axis=0)
    s_fb, s_tp, s_den = sums[0], sums[1], sums[2]

    n_f = jnp.float32(n)
    focal_plus_bce = s_fb / n_f                          # == focal.mean() + bce.mean()

    # Collapsed Tversky:  den = tp + ALPHA*fp + BETA*fn  was accumulated directly.
    tversky = 1.0 - (s_tp + SMOOTH) / (s_den + SMOOTH)

    # L2 penalty == sum_p ||p||_2^2. Fused XLA reduction (no extra pallas_call launch).
    l2_penalty = jnp.float32(0.0)
    for p in model_params:
        pf = p.reshape(-1).astype(jnp.float32)
        l2_penalty = l2_penalty + jnp.vdot(pf, pf)

    return LAMBDA1 * focal_plus_bce + LAMBDA2 * tversky + BETA * l2_penalty


# --- pure-JAX reference (faithful translation of the PyTorch module) ---
def _reference(pred, target, model_params):
    x = pred.astype(jnp.float32)
    y = target.astype(jnp.float32)
    bce = jnp.maximum(x, 0.0) - x * y + jnp.log1p(jnp.exp(-jnp.abs(x)))
    pt = jnp.exp(-bce)
    focal = (ALPHA * (1.0 - pt) ** GAMMA * bce).mean()
    bce_m = bce.mean()
    sig = jax.nn.sigmoid(x)
    tp = jnp.sum(y * sig)
    fn = jnp.sum(y * (1.0 - sig))
    fp = jnp.sum((1.0 - y) * sig)
    tversky = 1.0 - (tp + SMOOTH) / (tp + ALPHA * fp + BETA * fn + SMOOTH)
    l2 = sum(jnp.sum(p.astype(jnp.float32) ** 2) for p in model_params)
    return LAMBDA1 * (focal + bce_m) + LAMBDA2 * tversky + BETA * l2


if __name__ == "__main__":
    key = jax.random.PRNGKey(0)
    k1, k2, k3, k4, k5, k6 = jax.random.split(key, 6)

    # segmentation-style inputs, NCHW
    B, C, H, W = 2, 4, 16, 16
    pred = jax.random.normal(k1, (B, C, H, W), dtype=jnp.float32)
    target = (jax.random.uniform(k2, (B, C, H, W)) > 0.5).astype(jnp.float32)

    # deterministic synthetic "model parameters" (e.g. a small conv layer)
    w = 0.05 * jax.random.normal(k3, (C, C, 3, 3), dtype=jnp.float32)
    b = 0.05 * jax.random.normal(k4, (C,), dtype=jnp.float32)
    model_params = (w, b)

    out = combined_loss2(pred, target, model_params)
    jax.block_until_ready(out)
    ref = _reference(pred, target, model_params)
    assert jnp.allclose(out, ref, rtol=1e-5, atol=1e-5), (out, ref)

    # bf16 / odd-shape path: exercises padding and the 16-row sublane rounding.
    pred2 = jax.random.normal(k5, (2, 3, 7, 9), dtype=jnp.bfloat16)
    target2 = (jax.random.uniform(k6, (2, 3, 7, 9)) > 0.5).astype(jnp.bfloat16)
    out2 = combined_loss2(pred2, target2, model_params)
    jax.block_until_ready(out2)
    ref2 = _reference(pred2, target2, model_params)
    assert jnp.allclose(out2, ref2, rtol=1e-5, atol=1e-5), (out2, ref2)

    print("KERNEL_OK")
</pallas_src>

<mosaic_0001>
module attributes {stable_mosaic.version = 11 : i64} {
  func.func @kernel(%arg0: i32, %arg1: i32, %arg2: memref<8x128xf32, #tpu.memory_space<vmem>>, %arg3: memref<8x128xf32, #tpu.memory_space<vmem>>, %arg4: memref<3x8x128xf32, #tpu.memory_space<vmem>>, %arg5: memref<8x128xf32, #tpu.memory_space<vmem>>, %arg6: memref<8x128xf32, #tpu.memory_space<vmem>>, %arg7: memref<8x128xf32, #tpu.memory_space<vmem>>) attributes {dimension_semantics = [#tpu.dimension_semantics<parallel>, #tpu.dimension_semantics<arbitrary>], iteration_bounds = array<i64: 2, 1>, scalar_prefetch = 0 : i64, scratch_operands = 3 : i64, tpu.core_type = #tpu.core_type<tc>, window_params = [{transform_indices = @transform_0, window_bounds = array<i64: 8, 128>}, {transform_indices = @transform_1, window_bounds = array<i64: 8, 128>}, {transform_indices = @transform_2, window_bounds = array<i64: 3, 8, 128>}]} {
    %c0_i32 = arith.constant 0 : i32
    %0 = arith.cmpi eq, %arg1, %c0_i32 : i32
    %1 = arith.extui %0 : i1 to i32
    %c0_i32_0 = arith.constant 0 : i32
    %2 = arith.cmpi ne, %1, %c0_i32_0 : i32
    scf.if %2 {
      %cst_28 = arith.constant 0.000000e+00 : f32
      %55 = vector.broadcast %cst_28 : f32 to vector<8x128xf32>
      %c0_29 = arith.constant 0 : index
      %c0_30 = arith.constant 0 : index
      %56 = vector.load %arg5[%c0_29, %c0_30] : memref<8x128xf32, #tpu.memory_space<vmem>>, vector<8x128xf32>
      tpu.vector_store %arg5[%c0_29, %c0_30], %55 {strides = array<i32>} : memref<8x128xf32, #tpu.memory_space<vmem>>, vector<8x128xf32>,
      %c0_31 = arith.constant 0 : index
      %c0_32 = arith.constant 0 : index
      %57 = vector.load %arg6[%c0_31, %c0_32] : memref<8x128xf32, #tpu.memory_space<vmem>>, vector<8x128xf32>
      tpu.vector_store %arg6[%c0_31, %c0_32], %55 {strides = array<i32>} : memref<8x128xf32, #tpu.memory_space<vmem>>, vector<8x128xf32>,
      %c0_33 = arith.constant 0 : index
      %c0_34 = arith.constant 0 : index
      %58 = vector.load %arg7[%c0_33, %c0_34] : memref<8x128xf32, #tpu.memory_space<vmem>>, vector<8x128xf32>
      tpu.vector_store %arg7[%c0_33, %c0_34], %55 {strides = array<i32>} : memref<8x128xf32, #tpu.memory_space<vmem>>, vector<8x128xf32>,
    } else {
    }
    %c0 = arith.constant 0 : index
    %c0_1 = arith.constant 0 : index
    %3 = vector.load %arg5[%c0, %c0_1] : memref<8x128xf32, #tpu.memory_space<vmem>>, vector<8x128xf32>
    %c0_2 = arith.constant 0 : index
    %c0_3 = arith.constant 0 : index
    %4 = vector.load %arg6[%c0_2, %c0_3] : memref<8x128xf32, #tpu.memory_space<vmem>>, vector<8x128xf32>
    %c0_4 = arith.constant 0 : index
    %c0_5 = arith.constant 0 : index
    %5 = vector.load %arg7[%c0_4, %c0_5] : memref<8x128xf32, #tpu.memory_space<vmem>>, vector<8x128xf32>
    %c0_6 = arith.constant 0 : index
    %c0_7 = arith.constant 0 : index
    %6 = vector.load %arg2[%c0_6, %c0_7] : memref<8x128xf32, #tpu.memory_space<vmem>>, vector<8x128xf32>
    %c0_8 = arith.constant 0 : index
    %c0_9 = arith.constant 0 : index
    %7 = vector.load %arg3[%c0_8, %c0_9] : memref<8x128xf32, #tpu.memory_space<vmem>>, vector<8x128xf32>
    %8 = math.absf %6 : vector<8x128xf32>
    %cst = arith.constant 0.000000e+00 : f32
    %9 = vector.broadcast %cst : f32 to vector<8x128xf32>
    %10 = arith.subf %9, %8 : vector<8x128xf32>
    %11 = math.exp %10 : vector<8x128xf32>
    %cst_10 = arith.constant 0.000000e+00 : f32
    %12 = vector.broadcast %cst_10 : f32 to vector<8x128xf32>
    %13 = arith.maximumf %6, %12 : vector<8x128xf32>
    %14 = arith.mulf %6, %7 : vector<8x128xf32>
    %15 = arith.subf %13, %14 : vector<8x128xf32>
    %16 = math.log1p %11 : vector<8x128xf32>
    %17 = arith.addf %15, %16 : vector<8x128xf32>
    %cst_11 = arith.constant 0.000000e+00 : f32
    %18 = vector.broadcast %cst_11 : f32 to vector<8x128xf32>
    %19 = arith.subf %18, %17 : vector<8x128xf32>
    %20 = math.exp %19 : vector<8x128xf32>
    %cst_12 = arith.constant 1.000000e+00 : f32
    %21 = vector.broadcast %cst_12 : f32 to vector<8x128xf32>
    %22 = arith.subf %21, %20 : vector<8x128xf32>
    %23 = arith.mulf %22, %22 : vector<8x128xf32>
    %cst_13 = arith.constant 0.699999988 : f32
    %24 = vector.broadcast %cst_13 : f32 to vector<8x128xf32>
    %25 = arith.mulf %24, %23 : vector<8x128xf32>
    %cst_14 = arith.constant 1.000000e+00 : f32
    %26 = vector.broadcast %cst_14 : f32 to vector<8x128xf32>
    %27 = arith.addf %25, %26 : vector<8x128xf32>
    %28 = arith.mulf %27, %17 : vector<8x128xf32>
    %cst_15 = arith.constant 1.000000e+00 : f32
    %29 = vector.broadcast %cst_15 : f32 to vector<8x128xf32>
    %30 = arith.addf %29, %11 : vector<8x128xf32>
    %31 = tpu.reciprocal %30 {approx = true} : vector<8x128xf32> -> vector<8x128xf32>
    %32 = arith.mulf %30, %31 : vector<8x128xf32>
    %cst_16 = arith.constant 2.000000e+00 : f32
    %33 = vector.broadcast %cst_16 : f32 to vector<8x128xf32>
    %34 = arith.subf %33, %32 : vector<8x128xf32>
    %35 = arith.mulf %31, %34 : vector<8x128xf32>
    %cst_17 = arith.constant 0.000000e+00 : f32
    %36 = vector.broadcast %cst_17 : f32 to vector<8x128xf32>
    %37 = arith.cmpf oge, %6, %36 : vector<8x128xf32>
    %38 = arith.mulf %11, %35 : vector<8x128xf32>
    %39 = arith.select %37, %35, %38 : vector<8x128xi1>, vector<8x128xf32>
    %40 = arith.mulf %7, %39 : vector<8x128xf32>
    %cst_18 = arith.constant 0.699999988 : f32
    %41 = vector.broadcast %cst_18 : f32 to vector<8x128xf32>
    %42 = arith.mulf %41, %39 : vector<8x128xf32>
    %cst_19 = arith.constant 3.000000e-01 : f32
    %43 = vector.broadcast %cst_19 : f32 to vector<8x128xf32>
    %44 = arith.mulf %43, %7 : vector<8x128xf32>
    %45 = arith.addf %42, %44 : vector<8x128xf32>
    %46 = arith.addf %3, %28 : vector<8x128xf32>
    %47 = arith.addf %4, %40 : vector<8x128xf32>
    %48 = arith.addf %5, %45 : vector<8x128xf32>
    %c0_20 = arith.constant 0 : index
    %c0_21 = arith.constant 0 : index
    %49 = vector.load %arg5[%c0_20, %c0_21] : memref<8x128xf32, #tpu.memory_space<vmem>>, vector<8x128xf32>
    tpu.vector_store %arg5[%c0_20, %c0_21], %46 {strides = array<i32>} : memref<8x128xf32, #tpu.memory_space<vmem>>, vector<8x128xf32>,
    %c0_22 = arith.constant 0 : index
    %c0_23 = arith.constant 0 : index
    %50 = vector.load %arg6[%c0_22, %c0_23] : memref<8x128xf32, #tpu.memory_space<vmem>>, vector<8x128xf32>
    tpu.vector_store %arg6[%c0_22, %c0_23], %47 {strides = array<i32>} : memref<8x128xf32, #tpu.memory_space<vmem>>, vector<8x128xf32>,
    %c0_24 = arith.constant 0 : index
    %c0_25 = arith.constant 0 : index
    %51 = vector.load %arg7[%c0_24, %c0_25] : memref<8x128xf32, #tpu.memory_space<vmem>>, vector<8x128xf32>
    tpu.vector_store %arg7[%c0_24, %c0_25], %48 {strides = array<i32>} : memref<8x128xf32, #tpu.memory_space<vmem>>, vector<8x128xf32>,
    %c0_i32_26 = arith.constant 0 : i32
    %52 = arith.cmpi eq, %arg1, %c0_i32_26 : i32
    %53 = arith.extui %52 : i1 to i32
    %c0_i32_27 = arith.constant 0 : i32
    %54 = arith.cmpi ne, %53, %c0_i32_27 : i32
    scf.if %54 {
      %c0_28 = arith.constant 0 : index
      %c0_29 = arith.constant 0 : index
      %55 = vector.load %arg5[%c0_28, %c0_29] : memref<8x128xf32, #tpu.memory_space<vmem>>, vector<8x128xf32>
      %56 = vector.shape_cast %55 : vector<8x128xf32> to vector<1x8x128xf32>
      %cst_30 = arith.constant dense<0.000000e+00> : vector<1xf32>
      %57 = vector.multi_reduction <add>, %56, %cst_30 [1, 2] : vector<1x8x128xf32> to vector<1xf32>
      %58 = vector.shape_cast %57 : vector<1xf32> to vector<1x1x1xf32>
      %59 = vector.extract %58[0, 0, 0] : f32 from vector<1x1x1xf32>
      %60 = vector.broadcast %59 : f32 to vector<8x128xf32>
      %c0_31 = arith.constant 0 : index
      %c0_32 = arith.constant 0 : index
      %c0_33 = arith.constant 0 : index
      %61 = vector.load %arg4[%c0_31, %c0_32, %c0_33] : memref<3x8x128xf32, #tpu.memory_space<vmem>>, vector<1x8x128xf32>
      %62 = vector.shape_cast %61 : vector<1x8x128xf32> to vector<8x128xf32>
      %63 = vector.shape_cast %60 : vector<8x128xf32> to vector<1x8x128xf32>
      tpu.vector_store %arg4[%c0_31, %c0_32, %c0_33], %63 {strides = array<i32>} : memref<3x8x128xf32, #tpu.memory_space<vmem>>, vector<1x8x128xf32>,
      %c0_34 = arith.constant 0 : index
      %c0_35 = arith.constant 0 : index
      %64 = vector.load %arg6[%c0_34, %c0_35] : memref<8x128xf32, #tpu.memory_space<vmem>>, vector<8x128xf32>
      %65 = vector.shape_cast %64 : vector<8x128xf32> to vector<1x8x128xf32>
      %cst_36 = arith.constant dense<0.000000e+00> : vector<1xf32>
      %66 = vector.multi_reduction <add>, %65, %cst_36 [1, 2] : vector<1x8x128xf32> to vector<1xf32>
      %67 = vector.shape_cast %66 : vector<1xf32> to vector<1x1x1xf32>
      %68 = vector.extract %67[0, 0, 0] : f32 from vector<1x1x1xf32>
      %69 = vector.broadcast %68 : f32 to vector<8x128xf32>
      %c1 = arith.constant 1 : index
      %c0_37 = arith.constant 0 : index
      %c0_38 = arith.constant 0 : index
      %70 = vector.load %arg4[%c1, %c0_37, %c0_38] : memref<3x8x128xf32, #tpu.memory_space<vmem>>, vector<1x8x128xf32>
      %71 = vector.shape_cast %70 : vector<1x8x128xf32> to vector<8x128xf32>
      %72 = vector.shape_cast %69 : vector<8x128xf32> to vector<1x8x128xf32>
      tpu.vector_store %arg4[%c1, %c0_37, %c0_38], %72 {strides = array<i32>} : memref<3x8x128xf32, #tpu.memory_space<vmem>>, vector<1x8x128xf32>,
      %c0_39 = arith.constant 0 : index
      %c0_40 = arith.constant 0 : index
      %73 = vector.load %arg7[%c0_39, %c0_40] : memref<8x128xf32, #tpu.memory_space<vmem>>, vector<8x128xf32>
      %74 = vector.shape_cast %73 : vector<8x128xf32> to vector<1x8x128xf32>
      %cst_41 = arith.constant dense<0.000000e+00> : vector<1xf32>
      %75 = vector.multi_reduction <add>, %74, %cst_41 [1, 2] : vector<1x8x128xf32> to vector<1xf32>
      %76 = vector.shape_cast %75 : vector<1xf32> to vector<1x1x1xf32>
      %77 = vector.extract %76[0, 0, 0] : f32 from vector<1x1x1xf32>
      %78 = vector.broadcast %77 : f32 to vector<8x128xf32>
      %c2 = arith.constant 2 : index
      %c0_42 = arith.constant 0 : index
      %c0_43 = arith.constant 0 : index
      %79 = vector.load %arg4[%c2, %c0_42, %c0_43] : memref<3x8x128xf32, #tpu.memory_space<vmem>>, vector<1x8x128xf32>
      %80 = vector.shape_cast %79 : vector<1x8x128xf32> to vector<8x128xf32>
      %81 = vector.shape_cast %78 : vector<8x128xf32> to vector<1x8x128xf32>
      tpu.vector_store %arg4[%c2, %c0_42, %c0_43], %81 {strides = array<i32>} : memref<3x8x128xf32, #tpu.memory_space<vmem>>, vector<1x8x128xf32>,
    } else {
    }
    return
  }
  func.func @transform_0(%arg0: i32, %arg1: i32) -> (i32, i32) {
    %c1_i32 = arith.constant 1 : i32
    %0 = arith.muli %arg0, %c1_i32 : i32
    %1 = arith.addi %0, %arg1 : i32
    %c0_i32 = arith.constant 0 : i32
    %c0_i32_0 = arith.constant 0 : i32
    return %1, %c0_i32 : i32, i32
  }
  func.func @transform_1(%arg0: i32, %arg1: i32) -> (i32, i32) {
    %c1_i32 = arith.constant 1 : i32
    %0 = arith.muli %arg0, %c1_i32 : i32
    %1 = arith.addi %0, %arg1 : i32
    %c0_i32 = arith.constant 0 : i32
    %c0_i32_0 = arith.constant 0 : i32
    return %1, %c0_i32 : i32, i32
  }
  func.func @transform_2(%arg0: i32, %arg1: i32) -> (i32, i32, i32) {
    %c0_i32 = arith.constant 0 : i32
    %c0_i32_0 = arith.constant 0 : i32
    %c0_i32_1 = arith.constant 0 : i32
    return %arg0, %c0_i32, %c0_i32_0 : i32, i32, i32
  }
}

</mosaic_0001>

<llo_original>
// kernel: squeeze.4
$region0: #{squeeze.4}
  %s0 = inlined_call_operand.vmem [shape: f32[6], index: 0, kind: input, shape index: {}]
  %s1 = inlined_call_operand.vmem [shape: f32[2,3], index: 1, kind: output, shape index: {}]
  $region1: #{squeeze.4} parent=0
    #allocation0 [shape = 'u8[4096]{0}', space=vmem, size = 0x1000, scoped, tag = 'scoped mem for output reshape']
    #allocation1 [shape = 'u8[4096]{0}', space=vmem, size = 0x1000, scoped, tag = 'scoped mem for input reshape']
    %s3 = ssub.s32 2, 1
    %v4 = vld [vmem:[%s0] sm:%s3]
    %5 = vst [vmem:[#allocation1] sm:%s3] %v4
    %v6 = vld [vmem:[#allocation1] sm:$0x1]
    %vm7 = vcmask 23552
    %8 = vst.msk [vmem:[#allocation0] sm:$0x1] %vm7, %v6
    %v9 = vld [vmem:[#allocation1] sm:$0x1]
    %10 = vrot.lane.b32.xlu0 %v9, 125
    %v11 = vpop.permute.xlu0 %10
    %vm12 = vcmask 23552
    %s13 = scalar_lea.vmem [#allocation0], 1
    %14 = vst.msk [vmem:[%s13] sm:$0x1] %vm12, %v11
    %s16 = ssub.s32 4, 1
    %v17 = vld [vmem:[#allocation0] sm:%s16]
    %s19 = ssub.s32 4, 1
    %20 = vst [vmem:[%s1] sm:%s19] %v17

// kernel: combined_loss2.1
$region0: #{combined_loss2.1}
  #allocation0 [shape = 'u32[]', space=smem, size = 0x4, offset = 0x4, fixed_abs, tag = 'smem constant byte address 0x4 - core index']
  #allocation1 [shape = 'u32[72,128]{1,0:T(1,128)}', space=vmem, size = 0x9000, scoped, tag = 'internal scratch']
  #allocation2 [shape = 'f32[8,128]{1,0:T(8,128)}', space=vmem, size = 0x1000, scoped, tag = 'scratch operand']
  #allocation3 [shape = 'f32[8,128]{1,0:T(8,128)}', space=vmem, size = 0x1000, scoped, tag = 'scratch operand']
  #allocation4 [shape = 'f32[8,128]{1,0:T(8,128)}', space=vmem, size = 0x1000, scoped, tag = 'scratch operand']
  %s0 = inlined_call_operand.vmem [shape: f32[16,128], index: 0, kind: input, shape index: {}]
  %s1 = inlined_call_operand.vmem [shape: f32[16,128], index: 1, kind: input, shape index: {}]
  %s2 = inlined_call_operand.vmem [shape: f32[6,8,128], index: 2, kind: output, shape index: {}]
  %s3 = sld [smem:[#allocation0]]
  $region49: #{combined_loss2.1} parent=0
    _
  %s5 = ssub.s32 1, %s3
  %s6 = scalar_select 0, %s5, %s3
  loop: start=0, step=1, limit=4
  $region2: #{combined_loss2.1} parent=0 // loop_pre_header
    _
  $region3: #{combined_loss2.1} parent=0 // loop_header
    %s8 = sphi 0, %s12
    %p9 = scmp.ge.s32.totalorder %s8, 4
    %s15 = sphi 0, %s27
    %s16 = sphi 0, %s23
    %s17 = sphi 0, %s15
    %s18 = sphi 0, %s16
    %s19 = sphi 0, %s17
    %s20 = sphi 0, %s18
    %s32 = sphi 0, %s34
    %s35 = sphi 0, %s32
    %s36 = sphi 0, %s35
    %s52 = sphi 0, %s36
    %s60 = sphi 0, %s62
    %s63 = sphi 0, %s60
    %s64 = sphi 0, %s63
    %s80 = sphi 0, %s64
    %s86 = sphi 0, %s88
    %s89 = sphi 0, %s86
    %s90 = sphi 0, %s89
    %s106 = sphi 0, %s90
  $region4: #{combined_loss2.1} parent=0 // loop_header_branch
    %11 = sbr.rel (%p9) target = $region8
  $region5: #{combined_loss2.1} parent=0 // loop_body
    %s13 = ssub.s32 %s8, 1
    %s14 = ssub.s32 %s8, 2
    %s21 = sadd.s32 1, %s16
    %p22 = scmp.ge.s32.totalorder %s21, 1
    %s23 = scalar_select %p22, 0, %s21
    %s24 = sadd.s32 1, %s15
    %s25 = scalar_select %p22, %s24, %s15
    %p26 = scmp.ge.s32.totalorder %s25, 2
    %s27 = scalar_select %p26, 0, %s25
    %s28 = sadd.s32 %s15, %s16
    %s29 = sadd.s32 %s27, %s23
    %s30 = ssub.s32 %s28, %s29
    %p31 = scmp.eq.s32.totalorder %s30, 0
    %s33 = sadd.s32 %s32, 1
    %s34 = scalar_select %p31, %s32, %s33
    %p37 = pneg %p31
    %p38 = scmp.eq.s32.totalorder %s8, 1
    %p39 = por %p37, %p38
    %p40 = scmp.ne.s32.totalorder %s32, %s35
    %p41 = scmp.eq.s32.totalorder %s8, 0
    %p42 = por %p40, %p41
    %p43 = scmp.ne.s32.totalorder %s32, %s35
    %p44 = scmp.eq.s32.totalorder %s13, 1
    %p45 = por %p43, %p44
    %p46 = scmp.ne.s32.totalorder %s35, %s36
    %p47 = scmp.eq.s32.totalorder %s13, 0
    %p48 = por %p46, %p47
    %p49 = scmp.ne.s32.totalorder %s35, %s36
    %p50 = scmp.eq.s32.totalorder %s14, 1
    %p51 = por %p49, %p50
    %p53 = scmp.ne.s32.totalorder %s36, %s52
    %p54 = scmp.eq.s32.totalorder %s14, 0
    %p55 = por %p53, %p54
    %s56 = sadd.s32 %s15, %s16
    %s57 = sadd.s32 %s27, %s23
    %s58 = ssub.s32 %s56, %s57
    %p59 = scmp.eq.s32.totalorder %s58, 0
    %s61 = sadd.s32 %s60, 1
    %s62 = scalar_select %p59, %s60, %s61
    %p65 = pneg %p59
    %p66 = scmp.eq.s32.totalorder %s8, 1
    %p67 = por %p65, %p66
    %p68 = scmp.ne.s32.totalorder %s60, %s63
    %p69 = scmp.eq.s32.totalorder %s8, 0
    %p70 = por %p68, %p69
    %p71 = scmp.ne.s32.totalorder %s60, %s63
    %p72 = scmp.eq.s32.totalorder %s13, 1
    %p73 = por %p71, %p72
    %p74 = scmp.ne.s32.totalorder %s63, %s64
    %p75 = scmp.eq.s32.totalorder %s13, 0
    %p76 = por %p74, %p75
    %p77 = scmp.ne.s32.totalorder %s63, %s64
    %p78 = scmp.eq.s32.totalorder %s14, 1
    %p79 = por %p77, %p78
    %p81 = scmp.ne.s32.totalorder %s64, %s80
    %p82 = scmp.eq.s32.totalorder %s14, 0
    %p83 = por %p81, %p82
    %s84 = ssub.s32 %s15, %s27
    %p85 = scmp.eq.s32.totalorder %s84, 0
    %s87 = sadd.s32 %s86, 1
    %s88 = scalar_select %p85, %s86, %s87
    %p91 = pneg %p85
    %p92 = scmp.eq.s32.totalorder %s8, 1
    %p93 = por %p91, %p92
    %p94 = scmp.ne.s32.totalorder %s86, %s89
    %p95 = scmp.eq.s32.totalorder %s8, 0
    %p96 = por %p94, %p95
    %p97 = scmp.ne.s32.totalorder %s86, %s89
    %p98 = scmp.eq.s32.totalorder %s13, 1
    %p99 = por %p97, %p98
    %p100 = scmp.ne.s32.totalorder %s89, %s90
    %p101 = scmp.eq.s32.totalorder %s13, 0
    %p102 = por %p100, %p101
    %p103 = scmp.ne.s32.totalorder %s89, %s90
    %p104 = scmp.eq.s32.totalorder %s14, 1
    %p105 = por %p103, %p104
    %p107 = scmp.ne.s32.totalorder %s90, %s106
    %p108 = scmp.eq.s32.totalorder %s14, 0
    %p109 = por %p107, %p108
    %p110 = scmp.le.s32.totalorder 1, %s8
    %p111 = scmp.lt.s32.totalorder %s8, 3
    %p112 = pnand %p110, %p111
    %p113 = pneg %p112
    // Predicated region
    $region9: #{combined_loss2.1} parent=5 // pred_check
      _
    $region10: #{combined_loss2.1} parent=5 // pred_check_branch
      %115 = sbr.rel (%p112) target = $region12
    $region11: #{combined_loss2.1} parent=5 // pred_region
      %s116 = ssub.s32 %s8, 1
    $region12: #{combined_loss2.1} parent=5 // pred_fallthru
      _
    %p117 = scmp.lt.s32.totalorder %s8, 2
    // Predicated region
    $region13: #{combined_loss2.1} parent=5 // pred_check
      %p118 = pneg %p117
    $region14: #{combined_loss2.1} parent=5 // pred_check_branch
      %120 = sbr.rel (%p118) target = $region16
    $region15: #{combined_loss2.1} parent=5 // pred_region
      // Predicated region
      $region17: #{combined_loss2.1} parent=15 // pred_check
        %p121 = pneg %p42
      $region18: #{combined_loss2.1} parent=15 // pred_check_branch
        %123 = sbr.rel (%p121) target = $region20
      $region19: #{combined_loss2.1} parent=15 // pred_region
        %s124 = sadd.s32 %s15, %s16
        %p125 = scmp.lt.s32.totalorder %s124, 1
        %s126 = scalar_select %p125, %s124, 1
        %s127 = smul.addr %s126, 8
        %s128 = scalar_lea.vmem %s0, %s127
        %s129 = sadd.s32 %s15, %s16
      $region20: #{combined_loss2.1} parent=15 // pred_fallthru
        _
      // Predicated region
      $region21: #{combined_loss2.1} parent=15 // pred_check
        %p130 = pneg %p70
      $region22: #{combined_loss2.1} parent=15 // pred_check_branch
        %132 = sbr.rel (%p130) target = $region24
      $region23: #{combined_loss2.1} parent=15 // pred_region
        %s133 = sadd.s32 %s15, %s16
        %p134 = scmp.lt.s32.totalorder %s133, 1
        %s135 = scalar_select %p134, %s133, 1
        %s136 = smul.addr %s135, 8
        %s137 = scalar_lea.vmem %s1, %s136
        %s138 = sadd.s32 %s15, %s16
      $region24: #{combined_loss2.1} parent=15 // pred_fallthru
        _
    $region16: #{combined_loss2.1} parent=5 // pred_fallthru
      _
    %p139 = scmp.le.s32.totalorder 1, %s8
    %p140 = scmp.lt.s32.totalorder %s8, 3
    %p141 = pnand %p139, %p140
    %p142 = pneg %p141
    // Predicated region
    $region25: #{combined_loss2.1} parent=5 // pred_check
      _
    $region26: #{combined_loss2.1} parent=5 // pred_check_branch
      %144 = sbr.rel (%p141) target = $region28
    $region27: #{combined_loss2.1} parent=5 // pred_region
      %s145 = ssub.s32 %s8, 1
      %s146 = sadd.s32 %s17, %s18
      %p147 = scmp.lt.s32.totalorder %s146, 1
      %s148 = scalar_select %p147, %s146, 1
      %s149 = smul.addr %s148, 8
      %s150 = scalar_lea.vmem %s0, %s149
      %p151 = pneg %p48
      %p152 = pneg %p45
      %s153 = sadd.s32 %s17, %s18
      %p154 = scmp.lt.s32.totalorder %s153, 1
      %s155 = scalar_select %p154, %s153, 1
      %s156 = smul.addr %s155, 8
      %s157 = scalar_lea.vmem %s1, %s156
      %p158 = pneg %p76
      %p159 = pneg %p73
      %p160 = pneg %p102
      %p161 = pneg %p99
      %s162 = smul.u32 3, %s17
      %p163 = scmp.lt.s32.totalorder %s162, 5
      %s164 = scalar_select %p163, %s162, 5
      %s165 = smul.addr %s164, 8
      %s166 = scalar_lea.vmem %s2, %s165
      %s167 = sadd.s32 %s17, %s18
      %p168 = scmp.lt.s32.totalorder %s167, 1
      %s169 = scalar_select %p168, %s167, 1
      %s170 = smul.addr %s169, 8
      %s171 = scalar_lea.vmem %s0, %s170
      %s172 = sadd.s32 %s17, %s18
      %s173 = sadd.s32 %s17, %s18
      %p174 = scmp.lt.s32.totalorder %s173, 1
      %s175 = scalar_select %p174, %s173, 1
      %s176 = smul.addr %s175, 8
      %s177 = scalar_lea.vmem %s1, %s176
      %s178 = sadd.s32 %s17, %s18
      %s179 = smul.u32 3, %s17
      %p180 = scmp.lt.s32.totalorder %s179, 5
      %s181 = scalar_select %p180, %s179, 5
      %s182 = smul.addr %s181, 8
      %s183 = scalar_lea.vmem %s2, %s182
      %s184 = smul.u32 3, %s17
      %p185 = scmp.eq.s32.totalorder %s18, 0
      // Predicated region
      $region29: #{combined_loss2.1} parent=27 // pred_check
        %p186 = pneg %p185
      $region30: #{combined_loss2.1} parent=27 // pred_check_branch
        %188 = sbr.rel (%p186) target = $region32
      $region31: #{combined_loss2.1} parent=27 // pred_region
        %189 = vst [vmem:[#allocation2] sm:$0xff] 0.0
        %190 = vst [vmem:[#allocation3] sm:$0xff] 0.0
        %191 = vst [vmem:[#allocation4] sm:$0xff] 0.0
      $region32: #{combined_loss2.1} parent=27 // pred_fallthru
        _
      %v192 = vld [vmem:[#allocation2] sm:$0xff]
      %v193 = vld [vmem:[#allocation3] sm:$0xff]
      %v194 = vld [vmem:[#allocation4] sm:$0xff]
      %v195 = vld [vmem:[%s171] sm:$0xff]
      %v196 = vld [vmem:[%s177] sm:$0xff]
      %v197 = vand.u32 2147483647, %v195
      %v198 = vsub.f32 0.0, %v197
      %v199 = vmul.f32 %v198, 1.442695
      %v200 = vpow.pop %v199
      %v201 = vmax.f32 %v195, 0.0
      %v202 = vmul.f32 %v195, %v196
      %v203 = vsub.f32 %v201, %v202
      %v204 = vadd.f32 %v200, 1.0
      %v205 = vlog2.pop %v204
      %v206 = vmul.f32 %v205, 0.6931472
      %v207 = vmul.f32 -0.5, %v200
      %v208 = vadd.f32 %v207, 1.0
      %v209 = vmul.f32 %v208, %v200
      %v210 = vand.u32 2147483647, %v200
      %vm211 = vcmp.lt.f32.partialorder %v210, 0.0004427343
      %v212 = vsel %vm211, %v209, %v206
      %v213 = vadd.f32 %v203, %v212
      %v214 = vsub.f32 0.0, %v213
      %v215 = vmul.f32 %v214, 1.442695
      %v216 = vpow.pop %v215
      %v217 = vsub.f32 1.0, %v216
      %v218 = vmul.f32 %v217, %v217
      %v219 = vmul.f32 %v218, 0.7
      %v220 = vadd.f32 %v219, 1.0
      %v221 = vmul.f32 %v220, %v213
      %v222 = vadd.f32 %v200, 1.0
      %v223 = vrcp.pop %v222
      %v224 = vmul.f32 %v222, %v223
      %v225 = vsub.f32 2.0, %v224
      %v226 = vmul.f32 %v223, %v225
      %vm227 = vcmp.ge.f32.partialorder %v195, 0.0
      %v228 = vmul.f32 %v200, %v226
      %v229 = vsel %vm227, %v226, %v228
      %v230 = vmul.f32 %v196, %v229
      %v231 = vmul.f32 %v229, 0.7
      %v232 = vmul.f32 %v196, 0.3
      %v233 = vadd.f32 %v231, %v232
      %v234 = vadd.f32 %v192, %v221
      %v235 = vadd.f32 %v193, %v230
      %v236 = vadd.f32 %v194, %v233
      %237 = vst [vmem:[#allocation2] sm:$0xff] %v234
      %238 = vst [vmem:[#allocation3] sm:$0xff] %v235
      %239 = vst [vmem:[#allocation4] sm:$0xff] %v236
      // Predicated region
      $region33: #{combined_loss2.1} parent=27 // pred_check
        %p240 = pneg %p185
      $region34: #{combined_loss2.1} parent=27 // pred_check_branch
        %242 = sbr.rel (%p240) target = $region36
      $region35: #{combined_loss2.1} parent=27 // pred_region
        %v243 = vld [vmem:[#allocation2] sm:$0xff]
        %244 = vadd.xlane.f32.xlu0 %v243
        %v245 = vpop.xlane.xlu0 %244
        %v246 = vrot.slane %v245, 4
        %v247 = vadd.f32 %v245, %v246
        %v248 = vrot.slane %v247, 2
        %v249 = vadd.f32 %v247, %v248
        %v250 = vrot.slane %v249, 1
        %v251 = vadd.f32 %v249, %v250
        %s252 = vtos %v251
        %v253 = vstv %s252
        %254 = vst [vmem:[%s183] sm:$0xff] %v253
        %v255 = vld [vmem:[#allocation3] sm:$0xff]
        %256 = vadd.xlane.f32.xlu0 %v255
        %v257 = vpop.xlane.xlu0 %256
        %v258 = vrot.slane %v257, 4
        %v259 = vadd.f32 %v257, %v258
        %v260 = vrot.slane %v259, 2
        %v261 = vadd.f32 %v259, %v260
        %v262 = vrot.slane %v261, 1
        %v263 = vadd.f32 %v261, %v262
        %s264 = vtos %v263
        %v265 = vstv %s264
        %s266 = scalar_lea.vmem %s183, 8
        %267 = vst [vmem:[%s266] sm:$0xff] %v265
        %v268 = vld [vmem:[#allocation4] sm:$0xff]
        %269 = vadd.xlane.f32.xlu0 %v268
        %v270 = vpop.xlane.xlu0 %269
        %v271 = vrot.slane %v270, 4
        %v272 = vadd.f32 %v270, %v271
        %v273 = vrot.slane %v272, 2
        %v274 = vadd.f32 %v272, %v273
        %v275 = vrot.slane %v274, 1
        %v276 = vadd.f32 %v274, %v275
        %s277 = vtos %v276
        %v278 = vstv %s277
        %s279 = scalar_lea.vmem %s183, 16
        %280 = vst [vmem:[%s279] sm:$0xff] %v278
      $region36: #{combined_loss2.1} parent=27 // pred_fallthru
        _
      %s281 = smul.u32 3, %s17
      %p282 = scmp.lt.s32.totalorder %s281, 5
      %s283 = scalar_select %p282, %s281, 5
      %s284 = smul.addr %s283, 8
      %s285 = scalar_lea.vmem %s2, %s284
      // Predicated region
      $region37: #{combined_loss2.1} parent=27 // pred_check
        %p286 = pneg %p99
      $region38: #{combined_loss2.1} parent=27 // pred_check_branch
        %288 = sbr.rel (%p286) target = $region40
      $region39: #{combined_loss2.1} parent=27 // pred_region
        %s289 = smul.u32 3, %s17
      $region40: #{combined_loss2.1} parent=27 // pred_fallthru
        _
    $region28: #{combined_loss2.1} parent=5 // pred_fallthru
      _
    %p290 = scmp.le.s32.totalorder 2, %s8
    // Predicated region
    $region41: #{combined_loss2.1} parent=5 // pred_check
      %p291 = pneg %p290
    $region42: #{combined_loss2.1} parent=5 // pred_check_branch
      %293 = sbr.rel (%p291) target = $region44
    $region43: #{combined_loss2.1} parent=5 // pred_region
      %s294 = ssub.s32 %s8, 2
      // Predicated region
      $region45: #{combined_loss2.1} parent=43 // pred_check
        %p295 = pneg %p105
      $region46: #{combined_loss2.1} parent=43 // pred_check_branch
        %297 = sbr.rel (%p295) target = $region48
      $region47: #{combined_loss2.1} parent=43 // pred_region
        %s298 = smul.u32 3, %s19
        %p299 = scmp.lt.s32.totalorder %s298, 5
        %s300 = scalar_select %p299, %s298, 5
        %s301 = smul.addr %s300, 8
        %s302 = scalar_lea.vmem %s2, %s301
      $region48: #{combined_loss2.1} parent=43 // pred_fallthru
        _
    $region44: #{combined_loss2.1} parent=5 // pred_fallthru
      _
  $region6: #{combined_loss2.1} parent=0 // loop_footer
    %s12 = sadd.s32 1, %s8
  $region7: #{combined_loss2.1} parent=0 // loop_footer_branch
    %7 = sbr.rel target = $region3
  $region8: #{combined_loss2.1} parent=0 // loop_exit
    _

</llo_original>
